<compile_context>
chip_gen: v5e
topology: v5e:2x2
jax: 0.10.0
libtpu: 0.0.40
codegen_flags: <defaults>
</compile_context>

<pallas_src>
import functools

import jax
import jax.numpy as jnp
from jax.experimental import pallas as pl
from jax.experimental.pallas import tpu as pltpu

# quantization config (matches the quint8 case of the PyTorch test)
OUT_SCALE = 0.3
OUT_ZERO_POINT = 3
QDTYPE = "quint8"            # "quint8" -> [0, 255], "qint8" -> [-128, 127]

_QRANGE = {"quint8": (0.0, 255.0), "qint8": (-128.0, 127.0)}

_LANES = 128
_SUBLANES = 8
_TM_TARGET = 2048            # rows per block -> 1 MiB f32 per input buffer


def _round_up(x, m):
    return ((x + m - 1) // m) * m


def _qadd_relu_kernel(x_ref, y_ref, o_ref, *, out_scale, out_zp, qmin, qmax):
    x = x_ref[...]
    y = y_ref[...]

    # quantize_per_tensor(x, scale=1.0, zero_point=0, dtype):
    # round-half-to-even (torch uses nearbyint), then clamp to the q range.
    q1 = jnp.clip(jnp.round(x), qmin, qmax)
    q2 = jnp.clip(jnp.round(y), qmin, qmax)

    # quantized.add_relu: dequantize (scale=1, zp=0 -> identity), add, relu,
    # then requantize with (out_scale, out_zp). Use true division (matches the
    # reference bit-exactly; avoids 1-ulp reciprocal rounding flips).
    s = jnp.maximum(q1 + q2, 0.0)
    qo = jnp.clip(jnp.round(s / out_scale) + out_zp, qmin, qmax)

    # final dequantize
    o_ref[...] = (qo - out_zp) * out_scale


def quantized_add_relu(x1, x2, *, scale=OUT_SCALE, zero_point=OUT_ZERO_POINT,
                       qdtype=QDTYPE):
    assert x1.shape == x2.shape
    orig_shape = x1.shape
    qmin, qmax = _QRANGE[qdtype]

    n = x1.size
    x1f = x1.reshape(-1).astype(jnp.float32)
    x2f = x2.reshape(-1).astype(jnp.float32)

    # Fast path: when numel is already a multiple of 128 (typical for NCHW
    # activations) the reshape below is free — no full-array pad copy.
    rem = n % _LANES
    if rem:
        pad = _LANES - rem
        x1f = jnp.pad(x1f, (0, pad))
        x2f = jnp.pad(x2f, (0, pad))
    M = x1f.size // _LANES
    x1f = x1f.reshape(M, _LANES)
    x2f = x2f.reshape(M, _LANES)

    # Large lane-dense blocks amortize the ~0.35 us per-step overhead; the row
    # count is a multiple of 8 (sublanes) and the grid uses cdiv so an awkward
    # M never shrinks the block size (Pallas masks the ragged last block).
    tm = min(_TM_TARGET, _round_up(M, _SUBLANES))
    # Keep >= ~8 grid steps on large inputs so v7x's two TensorCores both get
    # work and DMA stays software-pipelined against compute.
    if M > 8 * _SUBLANES and pl.cdiv(M, tm) < 8:
        tm = max(_SUBLANES, _round_up(pl.cdiv(M, 8), _SUBLANES))
    grid = (pl.cdiv(M, tm),)

    # Explicit VMEM budget: (2 inputs + 1 output) double-buffered = 6 blocks,
    # plus headroom. Stays well under v7x's 64 MiB physical VMEM.
    block_bytes = tm * _LANES * 4
    vmem_limit = min(96 << 20, max(16 << 20, 8 * block_bytes))

    kernel = functools.partial(
        _qadd_relu_kernel,
        out_scale=float(scale),
        out_zp=float(zero_point),
        qmin=qmin,
        qmax=qmax,
    )

    # NOTE: input_output_aliases={0: 0} could save one HBM allocation but risks
    # a defensive copy (the caller still holds x1); skipped — bandwidth is the
    # same either way.
    out = pl.pallas_call(
        kernel,
        out_shape=jax.ShapeDtypeStruct((M, _LANES), jnp.float32),
        grid=grid,
        in_specs=[
            pl.BlockSpec((tm, _LANES), lambda i: (i, 0)),
            pl.BlockSpec((tm, _LANES), lambda i: (i, 0)),
        ],
        out_specs=pl.BlockSpec((tm, _LANES), lambda i: (i, 0)),
        compiler_params=pltpu.CompilerParams(
            dimension_semantics=("parallel",),
            vmem_limit_bytes=vmem_limit,
        ),
    )(x1f, x2f)

    out = out.reshape(-1)
    if rem:
        out = out[:n]
    return out.reshape(orig_shape)


def _reference(x1, x2, *, scale=OUT_SCALE, zero_point=OUT_ZERO_POINT,
               qdtype=QDTYPE):
    qmin, qmax = _QRANGE[qdtype]
    q1 = jnp.clip(jnp.round(x1.astype(jnp.float32)), qmin, qmax)
    q2 = jnp.clip(jnp.round(x2.astype(jnp.float32)), qmin, qmax)
    s = jnp.maximum(q1 + q2, 0.0)
    qo = jnp.clip(jnp.round(s / scale) + zero_point, qmin, qmax)
    return (qo - zero_point) * scale


if __name__ == "__main__":
    key = jax.random.PRNGKey(0)
    k1, k2 = jax.random.split(key)
    shape = (2, 4, 16, 16)  # NCHW
    # positive-ish values so quint8 quantization is meaningful
    x1 = jax.random.uniform(k1, shape, jnp.float32, minval=0.0, maxval=20.0)
    x2 = jax.random.uniform(k2, shape, jnp.float32, minval=0.0, maxval=20.0)

    out = quantized_add_relu(x1, x2)
    out = jax.block_until_ready(out)

    ref = _reference(x1, x2)
    assert out.shape == shape
    assert jnp.max(jnp.abs(out - ref)) < 1e-5

    # also exercise a ragged / non-128-aligned size to cover the pad path
    x3 = jax.random.uniform(k1, (3, 5, 7, 11), jnp.float32, 0.0, 20.0)
    x4 = jax.random.uniform(k2, (3, 5, 7, 11), jnp.float32, 0.0, 20.0)
    out2 = jax.block_until_ready(quantized_add_relu(x3, x4))
    assert jnp.max(jnp.abs(out2 - _reference(x3, x4))) < 1e-5

    print("KERNEL_OK")
</pallas_src>

<mosaic_0001>
module attributes {stable_mosaic.version = 11 : i64} {
  func.func @_qadd_relu_kernel(%arg0: i32, %arg1: memref<16x128xf32, #tpu.memory_space<vmem>>, %arg2: memref<16x128xf32, #tpu.memory_space<vmem>>, %arg3: memref<16x128xf32, #tpu.memory_space<vmem>>) attributes {dimension_semantics = [#tpu.dimension_semantics<parallel>], iteration_bounds = array<i64: 1>, scalar_prefetch = 0 : i64, scratch_operands = 0 : i64, tpu.core_type = #tpu.core_type<tc>, window_params = [{transform_indices = @transform_0, window_bounds = array<i64: 16, 128>}, {transform_indices = @transform_1, window_bounds = array<i64: 16, 128>}, {transform_indices = @transform_2, window_bounds = array<i64: 16, 128>}]} {
    %c0 = arith.constant 0 : index
    %c0_0 = arith.constant 0 : index
    %0 = vector.load %arg1[%c0, %c0_0] : memref<16x128xf32, #tpu.memory_space<vmem>>, vector<16x128xf32>
    %c0_1 = arith.constant 0 : index
    %c0_2 = arith.constant 0 : index
    %1 = vector.load %arg2[%c0_1, %c0_2] : memref<16x128xf32, #tpu.memory_space<vmem>>, vector<16x128xf32>
    %2 = math.roundeven %0 : vector<16x128xf32>
    %cst = arith.constant 0.000000e+00 : f32
    %cst_3 = arith.constant 2.550000e+02 : f32
    %3 = vector.broadcast %cst : f32 to vector<16x128xf32>
    %4 = arith.maximumf %3, %2 : vector<16x128xf32>
    %5 = vector.broadcast %cst_3 : f32 to vector<16x128xf32>
    %6 = arith.minimumf %5, %4 : vector<16x128xf32>
    %7 = math.roundeven %1 : vector<16x128xf32>
    %cst_4 = arith.constant 0.000000e+00 : f32
    %cst_5 = arith.constant 2.550000e+02 : f32
    %8 = vector.broadcast %cst_4 : f32 to vector<16x128xf32>
    %9 = arith.maximumf %8, %7 : vector<16x128xf32>
    %10 = vector.broadcast %cst_5 : f32 to vector<16x128xf32>
    %11 = arith.minimumf %10, %9 : vector<16x128xf32>
    %12 = arith.addf %6, %11 : vector<16x128xf32>
    %cst_6 = arith.constant 0.000000e+00 : f32
    %13 = vector.broadcast %cst_6 : f32 to vector<16x128xf32>
    %14 = arith.maximumf %12, %13 : vector<16x128xf32>
    %cst_7 = arith.constant 3.000000e-01 : f32
    %15 = vector.broadcast %cst_7 : f32 to vector<16x128xf32>
    %16 = arith.divf %14, %15 : vector<16x128xf32>
    %17 = math.roundeven %16 : vector<16x128xf32>
    %cst_8 = arith.constant 3.000000e+00 : f32
    %18 = vector.broadcast %cst_8 : f32 to vector<16x128xf32>
    %19 = arith.addf %17, %18 : vector<16x128xf32>
    %cst_9 = arith.constant 0.000000e+00 : f32
    %cst_10 = arith.constant 2.550000e+02 : f32
    %20 = vector.broadcast %cst_9 : f32 to vector<16x128xf32>
    %21 = arith.maximumf %20, %19 : vector<16x128xf32>
    %22 = vector.broadcast %cst_10 : f32 to vector<16x128xf32>
    %23 = arith.minimumf %22, %21 : vector<16x128xf32>
    %cst_11 = arith.constant 3.000000e+00 : f32
    %24 = vector.broadcast %cst_11 : f32 to vector<16x128xf32>
    %25 = arith.subf %23, %24 : vector<16x128xf32>
    %cst_12 = arith.constant 3.000000e-01 : f32
    %26 = vector.broadcast %cst_12 : f32 to vector<16x128xf32>
    %27 = arith.mulf %25, %26 : vector<16x128xf32>
    %c0_13 = arith.constant 0 : index
    %c0_14 = arith.constant 0 : index
    %28 = vector.load %arg3[%c0_13, %c0_14] : memref<16x128xf32, #tpu.memory_space<vmem>>, vector<16x128xf32>
    tpu.vector_store %arg3[%c0_13, %c0_14], %27 {strides = array<i32>} : memref<16x128xf32, #tpu.memory_space<vmem>>, vector<16x128xf32>,
    return
  }
  func.func @transform_0(%arg0: i32) -> (i32, i32) {
    %c0_i32 = arith.constant 0 : i32
    %c0_i32_0 = arith.constant 0 : i32
    return %arg0, %c0_i32 : i32, i32
  }
  func.func @transform_1(%arg0: i32) -> (i32, i32) {
    %c0_i32 = arith.constant 0 : i32
    %c0_i32_0 = arith.constant 0 : i32
    return %arg0, %c0_i32 : i32, i32
  }
  func.func @transform_2(%arg0: i32) -> (i32, i32) {
    %c0_i32 = arith.constant 0 : i32
    %c0_i32_0 = arith.constant 0 : i32
    return %arg0, %c0_i32 : i32, i32
  }
}

</mosaic_0001>

<llo_original>
// kernel: tpu_custom_call.1
$region0: #{tpu_custom_call.1}
  #allocation0 [shape = 'u32[]', space=smem, size = 0x4, offset = 0x4, fixed_abs, tag = 'smem constant byte address 0x4 - core index']
  #allocation1 [shape = 'u32[72,128]{1,0:T(1,128)}', space=vmem, size = 0x9000, scoped, tag = 'internal scratch']
  %s0 = inlined_call_operand.hbm [shape: f32[16,128], index: 0, kind: input, shape index: {}]
  %s1 = inlined_call_operand.hbm [shape: f32[16,128], index: 1, kind: input, shape index: {}]
  %s2 = inlined_call_operand.hbm [shape: f32[16,128], index: 2, kind: output, shape index: {}]
  %s3 = sld [smem:[#allocation0]]
  $region26: #{tpu_custom_call.1} parent=0
    _
  %s5 = ssub.s32 1, %s3
  %s6 = scalar_select 0, %s5, %s3
  $region1: #{tpu_custom_call.1} parent=0
    #allocation2 [shape = 'u8[8192]{0}', space=vmem, size = 0x2000, scoped, tag = 'input window, operand 0, single buffered']
    #allocation3 [shape = 's32[1]{0}', space=sflag, size = 0x4, scoped, tag = 'scoped memory for tpu_custom_call.1']
    #allocation4 [shape = 's32[1]{0}', space=sflag, size = 0x4, scoped, tag = 'scoped memory for tpu_custom_call.1']
    #allocation5 [shape = 'u8[8192]{0}', space=vmem, size = 0x2000, scoped, tag = 'input window, operand 1, single buffered']
    #allocation6 [shape = 's32[1]{0}', space=sflag, size = 0x4, scoped, tag = 'scoped memory for tpu_custom_call.1']
    #allocation7 [shape = 'u8[8192]{0}', space=vmem, size = 0x2000, scoped, tag = 'output window, operand 0, single buffered']
    %7 = vsyncpa [#allocation3], 0
    %8 = vsyncpa [#allocation6], 0
    %9 = vsyncpa [#allocation4], 0
    // Predicated region
    $region2: #{tpu_custom_call.1} parent=1 // pred_check
      _
    $region3: #{tpu_custom_call.1} parent=1 // pred_check_branch
      %11 = sbr.rel (0) target = $region5
    $region4: #{tpu_custom_call.1} parent=1 // pred_region
      %13 = vsyncadd [#allocation3], 0
      %s14 = sshll.u32 %s0, 4
      %s15 = int_to_ptr.hbm [resolvable:$true] %s14
      %s16 = sshll.u32 [#allocation2], 4
      %s17 = int_to_ptr.vmem [resolvable:$true] %s16
      %22 = dma.hbm_to_vmem [thread:$0]  %s15, 256, %s17, [#allocation3], 128, 128, 8
    $region5: #{tpu_custom_call.1} parent=1 // pred_fallthru
      _
    // Predicated region
    $region6: #{tpu_custom_call.1} parent=1 // pred_check
      _
    $region7: #{tpu_custom_call.1} parent=1 // pred_check_branch
      %24 = sbr.rel (0) target = $region9
    $region8: #{tpu_custom_call.1} parent=1 // pred_region
      %26 = vsyncadd [#allocation6], 0
      %s27 = sshll.u32 %s1, 4
      %s28 = int_to_ptr.hbm [resolvable:$true] %s27
      %s29 = sshll.u32 [#allocation5], 4
      %s30 = int_to_ptr.vmem [resolvable:$true] %s29
      %35 = dma.hbm_to_vmem [thread:$0]  %s28, 256, %s30, [#allocation6], 128, 128, 8
    $region9: #{tpu_custom_call.1} parent=1 // pred_fallthru
      _
    // Predicated region
    $region10: #{tpu_custom_call.1} parent=1 // pred_check
      _
    $region11: #{tpu_custom_call.1} parent=1 // pred_check_branch
      %37 = sbr.rel (0) target = $region13
    $region12: #{tpu_custom_call.1} parent=1 // pred_region
      %39 = dma.done [#allocation3], 256
    $region13: #{tpu_custom_call.1} parent=1 // pred_fallthru
      _
    // Predicated region
    $region14: #{tpu_custom_call.1} parent=1 // pred_check
      _
    $region15: #{tpu_custom_call.1} parent=1 // pred_check_branch
      %41 = sbr.rel (0) target = $region17
    $region16: #{tpu_custom_call.1} parent=1 // pred_region
      %43 = dma.done [#allocation6], 256
    $region17: #{tpu_custom_call.1} parent=1 // pred_fallthru
      _
    %v44 = vld [vmem:[#allocation2] sm:$0xff]
    %v45 = vld [vmem:[#allocation2 + $0x8] sm:$0xff]
    %v46 = vld [vmem:[#allocation5] sm:$0xff]
    %v47 = vld [vmem:[#allocation5 + $0x8] sm:$0xff]
    %v48 = vround.ne.pseudo %v44
    %v49 = vround.ne.pseudo %v45
    %v50 = vmax.f32 %v48, 0.0
    %v51 = vmax.f32 %v49, 0.0
    %v52 = vmin.f32 %v50, 255.0
    %v53 = vmin.f32 %v51, 255.0
    %v54 = vround.ne.pseudo %v46
    %v55 = vround.ne.pseudo %v47
    %v56 = vmax.f32 %v54, 0.0
    %v57 = vmax.f32 %v55, 0.0
    %v58 = vmin.f32 %v56, 255.0
    %v59 = vmin.f32 %v57, 255.0
    %v60 = vadd.f32 %v52, %v58
    %v61 = vadd.f32 %v53, %v59
    %v62 = vmax.f32 %v60, 0.0
    %v63 = vmax.f32 %v61, 0.0
    %v64 = vrcp.pop 0.3
    %v65 = vmul.f32 0.3, %v64
    %v66 = vsub.f32 1.0, %v65
    %v67 = vmul.f32 %v64, %v66
    %v68 = vadd.f32 %v64, %v67
    %vm69 = vweird.f32 %v64
    %v70 = vsel %vm69, %v64, %v68
    %v71 = vmul.f32 %v62, %v70
    %v72 = vmul.f32 %v63, %v70
    %v73 = vround.ne.pseudo %v71
    %v74 = vround.ne.pseudo %v72
    %v75 = vadd.f32 %v73, 3.0
    %v76 = vadd.f32 %v74, 3.0
    %v77 = vmax.f32 %v75, 0.0
    %v78 = vmax.f32 %v76, 0.0
    %v79 = vmin.f32 %v77, 255.0
    %v80 = vmin.f32 %v78, 255.0
    %v81 = vsub.f32 %v79, 3.0
    %v82 = vsub.f32 %v80, 3.0
    %v83 = vmul.f32 %v81, 0.3
    %v84 = vmul.f32 %v82, 0.3
    %85 = vst [vmem:[#allocation7] sm:$0xff] %v83
    %86 = vst [vmem:[#allocation7 + $0x8] sm:$0xff] %v84
    // Predicated region
    $region18: #{tpu_custom_call.1} parent=1 // pred_check
      _
    $region19: #{tpu_custom_call.1} parent=1 // pred_check_branch
      %88 = sbr.rel (0) target = $region21
    $region20: #{tpu_custom_call.1} parent=1 // pred_region
      %90 = vsyncadd [#allocation4], 0
      %s91 = sshll.u32 [#allocation7], 4
      %s92 = int_to_ptr.vmem [resolvable:$true] %s91
      %s93 = sshll.u32 %s2, 4
      %s94 = int_to_ptr.hbm [resolvable:$true] %s93
      %99 = dma.vmem_to_hbm [thread:$0]  %s92, 256, %s94, [#allocation4], 128, 128, 8
    $region21: #{tpu_custom_call.1} parent=1 // pred_fallthru
      _
    // Predicated region
    $region22: #{tpu_custom_call.1} parent=1 // pred_check
      _
    $region23: #{tpu_custom_call.1} parent=1 // pred_check_branch
      %101 = sbr.rel (0) target = $region25
    $region24: #{tpu_custom_call.1} parent=1 // pred_region
      %103 = dma.done [#allocation4], 256
    $region25: #{tpu_custom_call.1} parent=1 // pred_fallthru
      _
    %104 = vsyncpa [#allocation3], 1
    %105 = vsyncpa [#allocation6], 1
    %106 = vsyncpa [#allocation4], 1

</llo_original>
